<compile_context>
chip_gen: v7x
topology: tpu7x:2x2x1
jax: 0.10.0
libtpu: 0.0.40
codegen_flags: <defaults>
</compile_context>

<pallas_src>
import jax
import jax.numpy as jnp
from jax.experimental import pallas as pl
from jax.experimental.pallas import tpu as pltpu


_LANE = 512                       # lane width of the repacked slab (multiple of 128)
_TARGET_TILE_BYTES = 2 * 1024 * 1024  # ~2 MiB tile: safe on v5e/v6e/v7x with double buffering


def _clipped_tanh_kernel(x_ref, o_ref):
    # EUP tanh + one VPU fused scale/add; compute in f32, cast only at the store.
    x = x_ref[...].astype(jnp.float32)
    o_ref[...] = (0.5 + 0.4995 * jnp.tanh(x)).astype(o_ref.dtype)


def _min_sublane(dtype):
    itemsize = jnp.dtype(dtype).itemsize
    return {4: 8, 2: 16, 1: 32}.get(itemsize, 8)


def _run_2d(x2d, rows, lane, dtype):
    """Tile a (rows, lane) slab over a 1-D row grid and apply the kernel."""
    itemsize = jnp.dtype(dtype).itemsize
    sublane = _min_sublane(dtype)

    if rows < sublane:
        # Block equals the full (small) row extent -- allowed regardless of the
        # (sublane, 128) divisibility rule.
        tm = rows
    else:
        # Largest sublane-aligned row count that keeps the tile <= ~2 MiB ...
        tm_cap = max(sublane, (_TARGET_TILE_BYTES // (lane * itemsize)) // sublane * sublane)
        # ... but also aim for >= 2 grid steps so v7x's two TensorCores both get work.
        tm_half = -(-(-(-rows // 2)) // sublane) * sublane
        tm_full = -(-rows // sublane) * sublane
        tm = max(sublane, min(tm_cap, tm_half, tm_full))

    grid = (pl.cdiv(rows, tm),)

    return pl.pallas_call(
        _clipped_tanh_kernel,
        out_shape=jax.ShapeDtypeStruct((rows, lane), dtype),
        grid=grid,
        in_specs=[pl.BlockSpec((tm, lane), lambda i: (i, 0))],
        out_specs=pl.BlockSpec((tm, lane), lambda i: (i, 0)),
        compiler_params=pltpu.CompilerParams(
            dimension_semantics=("parallel",),
        ),
    )(x2d)


def clipped_tanh(x):
    """Pallas implementation of ClippedTanh.forward: 0.5 * (1 + 0.999 * tanh(x))."""
    orig_shape = x.shape
    dtype = x.dtype
    n = x.size
    if n == 0:
        return x

    itemsize = jnp.dtype(dtype).itemsize
    sublane = _min_sublane(dtype)

    # Fast path: already lane-dense -- collapse leading dims into rows, no repack.
    if (x.ndim >= 2
            and orig_shape[-1] % 128 == 0
            and orig_shape[-1] * sublane * itemsize <= _TARGET_TILE_BYTES):
        lane = orig_shape[-1]
        rows = n // lane
        out2d = _run_2d(x.reshape(rows, lane), rows, lane, dtype)
        return out2d.reshape(orig_shape)

    # Generic path: flatten and pad only up to the next _LANE multiple (<= 511 elems).
    lane = _LANE
    flat = x.reshape(-1)
    rows = -(-n // lane)
    padded_n = rows * lane
    if padded_n != n:
        flat = jnp.pad(flat, (0, padded_n - n))
    out2d = _run_2d(flat.reshape(rows, lane), rows, lane, dtype)
    out_flat = out2d.reshape(-1)
    if padded_n != n:
        out_flat = out_flat[:n]
    return out_flat.reshape(orig_shape)


def _reference(x):
    xf = x.astype(jnp.float32)
    return (0.5 * (1.0 + 0.999 * jnp.tanh(xf))).astype(x.dtype)


if __name__ == "__main__":
    key = jax.random.PRNGKey(0)
    k1, k2, k3, k4 = jax.random.split(key, 4)

    # Conv-style activation input (generic repack path, exact lane multiple, no pad).
    x = jax.random.normal(k1, (2, 4, 16, 16), jnp.float32)
    y = clipped_tanh(x)
    jax.block_until_ready(y)
    assert y.shape == x.shape
    assert jnp.allclose(y, _reference(x), atol=1e-6, rtol=1e-6)

    # Ragged (non-128-aligned) shape: exercises the pad/slice generic path.
    x2 = jax.random.normal(k2, (3, 7, 5), jnp.float32) * 4.0
    y2 = clipped_tanh(x2)
    jax.block_until_ready(y2)
    assert y2.shape == x2.shape
    assert jnp.allclose(y2, _reference(x2), atol=1e-6, rtol=1e-6)

    # Lane-dense fast path (last dim % 128 == 0): tiled directly, no repack.
    x3 = jax.random.normal(k3, (8, 4, 128), jnp.float32)
    y3 = clipped_tanh(x3)
    jax.block_until_ready(y3)
    assert y3.shape == x3.shape
    assert jnp.allclose(y3, _reference(x3), atol=1e-6, rtol=1e-6)

    # bf16 I/O: kernel computes in f32 and casts on store.
    x4 = (jax.random.normal(k4, (2, 8, 256), jnp.float32) * 2.0).astype(jnp.bfloat16)
    y4 = clipped_tanh(x4)
    jax.block_until_ready(y4)
    assert y4.shape == x4.shape
    assert jnp.allclose(y4.astype(jnp.float32), _reference(x4).astype(jnp.float32),
                        atol=1e-2, rtol=1e-2)

    print("KERNEL_OK")
</pallas_src>

<mosaic_0001>
module attributes {stable_mosaic.version = 11 : i64} {
  func.func @_clipped_tanh_kernel(%arg0: i32, %arg1: memref<4x512xf32, #tpu.memory_space<vmem>>, %arg2: memref<4x512xf32, #tpu.memory_space<vmem>>) attributes {dimension_semantics = [#tpu.dimension_semantics<parallel>], iteration_bounds = array<i64: 1>, scalar_prefetch = 0 : i64, scratch_operands = 0 : i64, tpu.core_type = #tpu.core_type<tc>, window_params = [{transform_indices = @transform_0, window_bounds = array<i64: 4, 512>}, {transform_indices = @transform_1, window_bounds = array<i64: 4, 512>}]} {
    %c0 = arith.constant 0 : index
    %c0_0 = arith.constant 0 : index
    %0 = vector.load %arg1[%c0, %c0_0] : memref<4x512xf32, #tpu.memory_space<vmem>>, vector<4x512xf32>
    %1 = math.tanh %0 : vector<4x512xf32>
    %cst = arith.constant 4.995000e-01 : f32
    %2 = vector.broadcast %cst : f32 to vector<4x512xf32>
    %3 = arith.mulf %2, %1 : vector<4x512xf32>
    %cst_1 = arith.constant 5.000000e-01 : f32
    %4 = vector.broadcast %cst_1 : f32 to vector<4x512xf32>
    %5 = arith.addf %4, %3 : vector<4x512xf32>
    %c0_2 = arith.constant 0 : index
    %c0_3 = arith.constant 0 : index
    %6 = vector.load %arg2[%c0_2, %c0_3] : memref<4x512xf32, #tpu.memory_space<vmem>>, vector<4x512xf32>
    tpu.vector_store %arg2[%c0_2, %c0_3], %5 {strides = array<i32>} : memref<4x512xf32, #tpu.memory_space<vmem>>, vector<4x512xf32>,
    return
  }
  func.func @transform_0(%arg0: i32) -> (i32, i32) {
    %c0_i32 = arith.constant 0 : i32
    %c0_i32_0 = arith.constant 0 : i32
    return %arg0, %c0_i32 : i32, i32
  }
  func.func @transform_1(%arg0: i32) -> (i32, i32) {
    %c0_i32 = arith.constant 0 : i32
    %c0_i32_0 = arith.constant 0 : i32
    return %arg0, %c0_i32 : i32, i32
  }
}

</mosaic_0001>

<llo_original>
// kernel: tpu_custom_call.1
$region0: #{tpu_custom_call.1}
  #allocation0 [shape = 'u32[]', space=smem, size = 0x4, offset = 0x4, fixed_abs, tag = 'smem constant byte address 0x4 - core index']
  #allocation1 [shape = 'u32[144,128]{1,0:T(1,128)}', space=vmem, size = 0x12000, scoped, tag = 'internal scratch']
  %s0 = inlined_call_operand.hbm [shape: f32[4,512], index: 0, kind: input, shape index: {}]
  %s1 = inlined_call_operand.hbm [shape: f32[4,512], index: 1, kind: output, shape index: {}]
  %s2 = sld [smem:[#allocation0]]
  $region18: #{tpu_custom_call.1} parent=0
    _
  %s4 = ssub.s32 1, %s2
  %s5 = scalar_select 0, %s4, %s2
  $region1: #{tpu_custom_call.1} parent=0
    #allocation2 [shape = 'u8[8192]{0}', space=vmem, size = 0x2000, scoped, tag = 'input window, operand 0, single buffered']
    #allocation3 [shape = 's32[1]{0}', space=sflag, size = 0x4, scoped, tag = 'scoped memory for tpu_custom_call.1']
    #allocation4 [shape = 's32[1]{0}', space=sflag, size = 0x4, scoped, tag = 'scoped memory for tpu_custom_call.1']
    #allocation5 [shape = 'u8[8192]{0}', space=vmem, size = 0x2000, scoped, tag = 'output window, operand 0, single buffered']
    %6 = vsyncpa [#allocation3], 0
    %7 = vsyncpa [#allocation4], 0
    // Predicated region
    $region2: #{tpu_custom_call.1} parent=1 // pred_check
      _
    $region3: #{tpu_custom_call.1} parent=1 // pred_check_branch
      %9 = sbr.rel (0) target = $region5
    $region4: #{tpu_custom_call.1} parent=1 // pred_region
      %s11 = ssub.s32 256, 256
      %12 = vsyncadd [#allocation3], %s11
      %s14 = sshll.u32 [#allocation2], 4
      %s15 = int_to_ptr.vmem [resolvable:$true] %s14
      %17 = dma.hbm_to_vmem [thread:$0]  %s0, 256, %s15, [#allocation3]
    $region5: #{tpu_custom_call.1} parent=1 // pred_fallthru
      _
    // Predicated region
    $region6: #{tpu_custom_call.1} parent=1 // pred_check
      _
    $region7: #{tpu_custom_call.1} parent=1 // pred_check_branch
      %19 = sbr.rel (0) target = $region9
    $region8: #{tpu_custom_call.1} parent=1 // pred_region
      %20 = dma.done [#allocation3], 256
    $region9: #{tpu_custom_call.1} parent=1 // pred_fallthru
      _
    %v21 = vld [vmem:[#allocation2] sm:$0xff]
    %v22 = vld [vmem:[#allocation2 + $0x8] sm:$0xff]
    %v23 = vtanh.pop %v21
    %v24 = vtanh.pop %v22
    %v25 = vmul.f32 %v23, 0.4995
    %v26 = vmul.f32 %v24, 0.4995
    %v27 = vadd.f32 %v25, 0.5
    %v28 = vadd.f32 %v26, 0.5
    %29 = vst [vmem:[#allocation5] sm:$0xff] %v27
    %30 = vst [vmem:[#allocation5 + $0x8] sm:$0xff] %v28
    // Predicated region
    $region10: #{tpu_custom_call.1} parent=1 // pred_check
      _
    $region11: #{tpu_custom_call.1} parent=1 // pred_check_branch
      %32 = sbr.rel (0) target = $region13
    $region12: #{tpu_custom_call.1} parent=1 // pred_region
      %s34 = ssub.s32 256, 256
      %35 = vsyncadd [#allocation4], %s34
      %s37 = sshll.u32 [#allocation5], 4
      %s38 = int_to_ptr.vmem [resolvable:$true] %s37
      %40 = dma.vmem_to_hbm [thread:$0]  %s38, 256, %s1, [#allocation4]
    $region13: #{tpu_custom_call.1} parent=1 // pred_fallthru
      _
    // Predicated region
    $region14: #{tpu_custom_call.1} parent=1 // pred_check
      _
    $region15: #{tpu_custom_call.1} parent=1 // pred_check_branch
      %42 = sbr.rel (0) target = $region17
    $region16: #{tpu_custom_call.1} parent=1 // pred_region
      %43 = dma.done [#allocation4], 256
    $region17: #{tpu_custom_call.1} parent=1 // pred_fallthru
      _
    %44 = vsyncpa [#allocation3], 1
    %45 = vsyncpa [#allocation4], 1

</llo_original>
